<compile_context>
chip_gen: v6e
topology: v6e:2x2x1
jax: 0.10.0
libtpu: 0.0.40
codegen_flags: <defaults>
</compile_context>

<pallas_src>
import functools

import jax
import jax.numpy as jnp
from jax.experimental import pallas as pl
from jax.experimental.pallas import tpu as pltpu

EPS = 1e-5  # PyTorch BatchNorm2d default eps


def _cse_kernel(inv_hw, hw, thw,
                x_ref, w1_ref, b1_ref, w2_ref, b2_ref, o_ref, acc_ref):
    s = pl.program_id(1)
    n_s = pl.num_programs(1)

    x_t = x_ref[0].astype(jnp.float32)  # (C, thw)

    rem = hw % thw  # static Python int
    if rem != 0:
        # Trailing tile is partial: mask out-of-bounds lanes before reducing.
        col = jax.lax.broadcasted_iota(jnp.int32, (1, thw), 1)
        limit = jnp.where(s == n_s - 1, rem, thw)
        x_t = jnp.where(col < limit, x_t, 0.0)

    # Per-step cross-lane reduce (XLU slot, hidden under the tile DMA) -> (C, 1).
    partial = jnp.sum(x_t, axis=-1, keepdims=True)

    @pl.when(s == 0)
    def _init():
        acc_ref[...] = partial          # init folded into the first step

    @pl.when(s != 0)
    def _accumulate():
        acc_ref[...] += partial

    @pl.when(s == n_s - 1)
    def _finalize():
        pooled = acc_ref[...] * inv_hw  # (C, 1) global average pool
        # Excitation: 1x1 convs as tiny matmuls (BN already folded into W/b).
        z1 = jnp.dot(w1_ref[...], pooled,
                     preferred_element_type=jnp.float32) + b1_ref[...]
        h = jnp.maximum(z1, 0.0)
        z2 = jnp.dot(w2_ref[...], h,
                     preferred_element_type=jnp.float32) + b2_ref[...]
        o_ref[...] = jax.nn.sigmoid(z2)[None].astype(o_ref.dtype)  # (1, C, 1)


def _vmem_capacity_bytes():
    """Per-core VMEM capacity; conservative fallback if the query fails."""
    try:
        return int(pltpu.get_tpu_info().vmem_capacity_bytes)
    except Exception:
        return 64 << 20  # v7x per-core VMEM — safe lower bound everywhere


def _pick_spatial_tile(hw, c, itemsize, vmem_cap):
    """Largest multiple-of-128 spatial tile within a generation-aware budget."""
    # ~1/8 of per-core VMEM, clamped to [2 MiB, 8 MiB]: ~88% of HBM roofline on
    # v7x (3.2 TB/s) while leaving headroom (2 TCs/chip, 64 MiB VMEM per core).
    budget = max(2 << 20, min(8 << 20, vmem_cap // 8))
    hw_pad = -(-hw // 128) * 128
    max_t = max(128, (budget // (itemsize * c)) // 128 * 128)
    return min(hw_pad, max_t)


def cse_forward(x, params, spatial_tile=None):
    """x: (N, C, H, W). Returns the (N, C, 1, 1) sigmoid gate, like the torch module."""
    N, C, H, W = x.shape
    HW = H * W
    C2 = C // 2
    w1, b1, g1, be1, m1, v1, w2, b2, g2, be2, m2, v2 = params

    # Fold eval-mode BatchNorm into the 1x1-conv weights/biases (wrapper-side, free).
    s1 = g1 * jax.lax.rsqrt(v1 + EPS)                                   # (C/2,)
    s2 = g2 * jax.lax.rsqrt(v2 + EPS)                                   # (C,)
    w1_f = (w1 * s1[:, None]).astype(jnp.float32)                       # (C/2, C)
    b1_f = ((b1 - m1) * s1 + be1).reshape(C2, 1).astype(jnp.float32)    # (C/2, 1)
    w2_f = (w2 * s2[:, None]).astype(jnp.float32)                       # (C, C/2)
    b2_f = ((b2 - m2) * s2 + be2).reshape(C, 1).astype(jnp.float32)     # (C, 1)

    vmem_cap = _vmem_capacity_bytes()
    itemsize = jnp.dtype(x.dtype).itemsize
    thw = (spatial_tile if spatial_tile is not None
           else _pick_spatial_tile(HW, C, itemsize, vmem_cap))
    assert thw % 128 == 0, "spatial tile must be a multiple of 128 lanes"
    n_s = pl.cdiv(HW, thw)  # trailing partial tile is masked in-kernel

    x3 = x.reshape(N, C, HW)  # free: H, W are contiguous in NCHW

    kernel = functools.partial(_cse_kernel, 1.0 / HW, HW, thw)

    # TODO(synk): when N < number of TensorCores (v7x small-batch), add a
    # parallel spatial-split grid axis producing partial pooled sums and do the
    # combine + excitation in the wrapper to keep the second core busy.
    grid_spec = pltpu.PrefetchScalarGridSpec(
        num_scalar_prefetch=0,
        grid=(N, n_s),
        in_specs=[
            pl.BlockSpec((1, C, thw), lambda n, s: (n, 0, s)),   # x tile (pipelined)
            pl.BlockSpec((C2, C), lambda n, s: (0, 0)),          # folded conv1 weight
            pl.BlockSpec((C2, 1), lambda n, s: (0, 0)),          # folded conv1 bias
            pl.BlockSpec((C, C2), lambda n, s: (0, 0)),          # folded conv2 weight
            pl.BlockSpec((C, 1), lambda n, s: (0, 0)),           # folded conv2 bias
        ],
        out_specs=pl.BlockSpec((1, C, 1), lambda n, s: (n, 0, 0)),
        scratch_shapes=[pltpu.VMEM((C, 1), jnp.float32)],        # (C,1) pooling acc
    )

    # Scoped VMEM: 2x tile (double-buffered x) + 2x weights + acc/out + slack.
    tile_bytes = C * thw * itemsize
    weights_bytes = 4 * (w1_f.size + b1_f.size + w2_f.size + b2_f.size)
    vmem_limit = 2 * tile_bytes + 2 * weights_bytes + 2 * (C * 128 * 4) + (4 << 20)
    vmem_limit = min(int(vmem_cap * 0.9), max(32 << 20, vmem_limit))

    cost = pl.CostEstimate(
        flops=N * C * HW + 4 * N * C * C2,
        transcendentals=N * C,
        bytes_accessed=N * C * HW * itemsize
        + (w1_f.size + b1_f.size + w2_f.size + b2_f.size + N * C) * 4,
    )

    out = pl.pallas_call(
        kernel,
        out_shape=jax.ShapeDtypeStruct((N, C, 1), jnp.float32),
        grid_spec=grid_spec,
        compiler_params=pltpu.CompilerParams(
            dimension_semantics=("parallel", "arbitrary"),
            vmem_limit_bytes=int(vmem_limit)),
        cost_estimate=cost,
    )(x3, w1_f, b1_f, w2_f, b2_f)
    return out.reshape(N, C, 1, 1)


def cse_reference(x, params):
    """Pure-JAX reference matching the PyTorch module (BN in eval mode)."""
    w1, b1, g1, be1, m1, v1, w2, b2, g2, be2, m2, v2 = params
    pooled = jnp.mean(x.astype(jnp.float32), axis=(2, 3))               # (N, C)
    z1 = pooled @ w1.T + b1
    z1 = (z1 - m1) * g1 * jax.lax.rsqrt(v1 + EPS) + be1
    h = jnp.maximum(z1, 0.0)
    z2 = h @ w2.T + b2
    z2 = (z2 - m2) * g2 * jax.lax.rsqrt(v2 + EPS) + be2
    g = jax.nn.sigmoid(z2)
    return g.reshape(g.shape[0], g.shape[1], 1, 1)


def init_params(key, out_channels):
    """Deterministic synthetic parameters matching the torch module's shapes."""
    C = out_channels
    C2 = C // 2
    ks = jax.random.split(key, 12)
    w1 = jax.random.normal(ks[0], (C2, C), jnp.float32) * 0.1
    b1 = jax.random.normal(ks[1], (C2,), jnp.float32) * 0.1
    w2 = jax.random.normal(ks[2], (C, C2), jnp.float32) * 0.1
    b2 = jax.random.normal(ks[3], (C,), jnp.float32) * 0.1
    # Non-trivial BN running stats / affine params (eval mode).
    g1 = 1.0 + 0.1 * jax.random.normal(ks[4], (C2,), jnp.float32)
    be1 = 0.1 * jax.random.normal(ks[5], (C2,), jnp.float32)
    m1 = 0.1 * jax.random.normal(ks[6], (C2,), jnp.float32)
    v1 = 0.5 + jnp.abs(jax.random.normal(ks[7], (C2,), jnp.float32)) * 0.1
    g2 = 1.0 + 0.1 * jax.random.normal(ks[8], (C,), jnp.float32)
    be2 = 0.1 * jax.random.normal(ks[9], (C,), jnp.float32)
    m2 = 0.1 * jax.random.normal(ks[10], (C,), jnp.float32)
    v2 = 0.5 + jnp.abs(jax.random.normal(ks[11], (C,), jnp.float32)) * 0.1
    return (w1, b1, g1, be1, m1, v1, w2, b2, g2, be2, m2, v2)


if __name__ == "__main__":
    key = jax.random.PRNGKey(0)
    kx, kx2, kx3, kp = jax.random.split(key, 4)

    # Case 1: small shapes consistent with the module (single spatial tile).
    N, C, H, W = 2, 4, 16, 16
    x = jax.random.normal(kx, (N, C, H, W), jnp.float32)
    params = init_params(kp, C)
    out = cse_forward(x, params)
    jax.block_until_ready(out)
    assert out.shape == (N, C, 1, 1)
    ref = cse_reference(x, params)
    assert jnp.allclose(out, ref, atol=1e-5, rtol=1e-5), "mismatch (single tile)"

    # Case 2: force a multi-step spatial grid to exercise tiled accumulation.
    H2, W2 = 16, 32                      # HW = 512 -> 4 spatial tiles of 128
    x2 = jax.random.normal(kx2, (N, C, H2, W2), jnp.float32)
    out2 = cse_forward(x2, params, spatial_tile=128)
    jax.block_until_ready(out2)
    assert out2.shape == (N, C, 1, 1)
    ref2 = cse_reference(x2, params)
    assert jnp.allclose(out2, ref2, atol=1e-5, rtol=1e-5), "mismatch (tiled)"

    # Case 3: non-128-divisible HW to exercise the masked trailing partial tile.
    H3, W3 = 12, 20                      # HW = 240 -> tiles of 128 + masked 112
    x3 = jax.random.normal(kx3, (N, C, H3, W3), jnp.float32)
    out3 = cse_forward(x3, params, spatial_tile=128)
    jax.block_until_ready(out3)
    assert out3.shape == (N, C, 1, 1)
    ref3 = cse_reference(x3, params)
    assert jnp.allclose(out3, ref3, atol=1e-5, rtol=1e-5), "mismatch (masked tail)"

    print("KERNEL_OK")
</pallas_src>

<mosaic_0001>
module attributes {stable_mosaic.version = 11 : i64} {
  func.func @_cse_kernel(%arg0: i32, %arg1: i32, %arg2: memref<1x4x256xf32, #tpu.memory_space<vmem>>, %arg3: memref<2x4xf32, #tpu.memory_space<vmem>>, %arg4: memref<2x1xf32, #tpu.memory_space<vmem>>, %arg5: memref<4x2xf32, #tpu.memory_space<vmem>>, %arg6: memref<4x1xf32, #tpu.memory_space<vmem>>, %arg7: memref<1x4x1xf32, #tpu.memory_space<vmem>>, %arg8: memref<4x1xf32, #tpu.memory_space<vmem>>) attributes {dimension_semantics = [#tpu.dimension_semantics<parallel>, #tpu.dimension_semantics<arbitrary>], iteration_bounds = array<i64: 2, 1>, scalar_prefetch = 0 : i64, scratch_operands = 1 : i64, tpu.core_type = #tpu.core_type<tc>, window_params = [{transform_indices = @transform_0, window_bounds = array<i64: 1, 4, 256>}, {pipeline_mode = #tpu.pipeline_mode<synchronous>, transform_indices = @transform_1, window_bounds = array<i64: 2, 4>}, {pipeline_mode = #tpu.pipeline_mode<synchronous>, transform_indices = @transform_2, window_bounds = array<i64: 2, 1>}, {pipeline_mode = #tpu.pipeline_mode<synchronous>, transform_indices = @transform_3, window_bounds = array<i64: 4, 2>}, {pipeline_mode = #tpu.pipeline_mode<synchronous>, transform_indices = @transform_4, window_bounds = array<i64: 4, 1>}, {transform_indices = @transform_5, window_bounds = array<i64: 1, 4, 1>}]} {
    %c0 = arith.constant 0 : index
    %c0_0 = arith.constant 0 : index
    %c0_1 = arith.constant 0 : index
    %0 = vector.load %arg2[%c0, %c0_0, %c0_1] : memref<1x4x256xf32, #tpu.memory_space<vmem>>, vector<1x4x256xf32>
    %1 = vector.shape_cast %0 : vector<1x4x256xf32> to vector<4x256xf32>
    %cst = arith.constant dense<0.000000e+00> : vector<4xf32>
    %2 = vector.multi_reduction <add>, %1, %cst [1] : vector<4x256xf32> to vector<4xf32>
    %3 = vector.shape_cast %2 : vector<4xf32> to vector<4x1xf32>
    %c0_i32 = arith.constant 0 : i32
    %4 = arith.cmpi eq, %arg1, %c0_i32 : i32
    %5 = arith.extui %4 : i1 to i32
    %c0_i32_2 = arith.constant 0 : i32
    %6 = arith.cmpi ne, %5, %c0_i32_2 : i32
    scf.if %6 {
      %c0_7 = arith.constant 0 : index
      %c0_8 = arith.constant 0 : index
      %13 = vector.load %arg8[%c0_7, %c0_8] : memref<4x1xf32, #tpu.memory_space<vmem>>, vector<4x1xf32>
      tpu.vector_store %arg8[%c0_7, %c0_8], %3 {strides = array<i32>} : memref<4x1xf32, #tpu.memory_space<vmem>>, vector<4x1xf32>,
    } else {
    }
    %c0_i32_3 = arith.constant 0 : i32
    %7 = arith.cmpi ne, %arg1, %c0_i32_3 : i32
    %8 = arith.extui %7 : i1 to i32
    %c0_i32_4 = arith.constant 0 : i32
    %9 = arith.cmpi ne, %8, %c0_i32_4 : i32
    scf.if %9 {
      %c0_7 = arith.constant 0 : index
      %c0_8 = arith.constant 0 : index
      %13 = vector.load %arg8[%c0_7, %c0_8] : memref<4x1xf32, #tpu.memory_space<vmem>>, vector<4x1xf32>
      %14 = arith.addf %13, %3 : vector<4x1xf32>
      %c0_9 = arith.constant 0 : index
      %c0_10 = arith.constant 0 : index
      %15 = vector.load %arg8[%c0_9, %c0_10] : memref<4x1xf32, #tpu.memory_space<vmem>>, vector<4x1xf32>
      tpu.vector_store %arg8[%c0_9, %c0_10], %14 {strides = array<i32>} : memref<4x1xf32, #tpu.memory_space<vmem>>, vector<4x1xf32>,
    } else {
    }
    %c0_i32_5 = arith.constant 0 : i32
    %10 = arith.cmpi eq, %arg1, %c0_i32_5 : i32
    %11 = arith.extui %10 : i1 to i32
    %c0_i32_6 = arith.constant 0 : i32
    %12 = arith.cmpi ne, %11, %c0_i32_6 : i32
    scf.if %12 {
      %c0_7 = arith.constant 0 : index
      %c0_8 = arith.constant 0 : index
      %13 = vector.load %arg8[%c0_7, %c0_8] : memref<4x1xf32, #tpu.memory_space<vmem>>, vector<4x1xf32>
      %cst_9 = arith.constant 3.906250e-03 : f32
      %14 = vector.broadcast %cst_9 : f32 to vector<4x1xf32>
      %15 = arith.mulf %13, %14 : vector<4x1xf32>
      %c0_10 = arith.constant 0 : index
      %c0_11 = arith.constant 0 : index
      %16 = vector.load %arg3[%c0_10, %c0_11] : memref<2x4xf32, #tpu.memory_space<vmem>>, vector<2x4xf32>
      %cst_12 = arith.constant dense<0.000000e+00> : vector<2x1xf32>
      %17 = tpu.matmul %16, %15, %cst_12 {dimension_numbers = #tpu.dot_dimension_numbers<[1], [0], [0], [1], [0, 0, 1, 1], [], []>} : vector<2x4xf32>, vector<4x1xf32>, vector<2x1xf32> -> vector<2x1xf32>
      %c0_13 = arith.constant 0 : index
      %c0_14 = arith.constant 0 : index
      %18 = vector.load %arg4[%c0_13, %c0_14] : memref<2x1xf32, #tpu.memory_space<vmem>>, vector<2x1xf32>
      %19 = arith.addf %17, %18 : vector<2x1xf32>
      %cst_15 = arith.constant 0.000000e+00 : f32
      %20 = vector.broadcast %cst_15 : f32 to vector<2x1xf32>
      %21 = arith.maximumf %19, %20 : vector<2x1xf32>
      %c0_16 = arith.constant 0 : index
      %c0_17 = arith.constant 0 : index
      %22 = vector.load %arg5[%c0_16, %c0_17] : memref<4x2xf32, #tpu.memory_space<vmem>>, vector<4x2xf32>
      %cst_18 = arith.constant dense<0.000000e+00> : vector<4x1xf32>
      %23 = tpu.matmul %22, %21, %cst_18 {dimension_numbers = #tpu.dot_dimension_numbers<[1], [0], [0], [1], [0, 0, 1, 1], [], []>} : vector<4x2xf32>, vector<2x1xf32>, vector<4x1xf32> -> vector<4x1xf32>
      %c0_19 = arith.constant 0 : index
      %c0_20 = arith.constant 0 : index
      %24 = vector.load %arg6[%c0_19, %c0_20] : memref<4x1xf32, #tpu.memory_space<vmem>>, vector<4x1xf32>
      %25 = arith.addf %23, %24 : vector<4x1xf32>
      %26 = arith.negf %25 : vector<4x1xf32>
      %27 = math.exp %26 : vector<4x1xf32>
      %cst_21 = arith.constant 1.000000e+00 : f32
      %28 = vector.broadcast %cst_21 : f32 to vector<4x1xf32>
      %29 = arith.addf %28, %27 : vector<4x1xf32>
      %30 = arith.divf %28, %29 : vector<4x1xf32>
      %31 = vector.shape_cast %30 : vector<4x1xf32> to vector<1x4x1xf32>
      %c0_22 = arith.constant 0 : index
      %c0_23 = arith.constant 0 : index
      %c0_24 = arith.constant 0 : index
      %32 = vector.load %arg7[%c0_22, %c0_23, %c0_24] : memref<1x4x1xf32, #tpu.memory_space<vmem>>, vector<1x4x1xf32>
      tpu.vector_store %arg7[%c0_22, %c0_23, %c0_24], %31 {strides = array<i32>} : memref<1x4x1xf32, #tpu.memory_space<vmem>>, vector<1x4x1xf32>,
    } else {
    }
    return
  }
  func.func @transform_0(%arg0: i32, %arg1: i32) -> (i32, i32, i32) {
    %c0_i32 = arith.constant 0 : i32
    %c0_i32_0 = arith.constant 0 : i32
    return %arg0, %c0_i32, %arg1 : i32, i32, i32
  }
  func.func @transform_1(%arg0: i32, %arg1: i32) -> (i32, i32) {
    %c0_i32 = arith.constant 0 : i32
    %c0_i32_0 = arith.constant 0 : i32
    %c0_i32_1 = arith.constant 0 : i32
    return %c0_i32, %c0_i32_0 : i32, i32
  }
  func.func @transform_2(%arg0: i32, %arg1: i32) -> (i32, i32) {
    %c0_i32 = arith.constant 0 : i32
    %c0_i32_0 = arith.constant 0 : i32
    %c0_i32_1 = arith.constant 0 : i32
    return %c0_i32, %c0_i32_0 : i32, i32
  }
  func.func @transform_3(%arg0: i32, %arg1: i32) -> (i32, i32) {
    %c0_i32 = arith.constant 0 : i32
    %c0_i32_0 = arith.constant 0 : i32
    %c0_i32_1 = arith.constant 0 : i32
    return %c0_i32, %c0_i32_0 : i32, i32
  }
  func.func @transform_4(%arg0: i32, %arg1: i32) -> (i32, i32) {
    %c0_i32 = arith.constant 0 : i32
    %c0_i32_0 = arith.constant 0 : i32
    %c0_i32_1 = arith.constant 0 : i32
    return %c0_i32, %c0_i32_0 : i32, i32
  }
  func.func @transform_5(%arg0: i32, %arg1: i32) -> (i32, i32, i32) {
    %c0_i32 = arith.constant 0 : i32
    %c0_i32_0 = arith.constant 0 : i32
    %c0_i32_1 = arith.constant 0 : i32
    return %arg0, %c0_i32, %c0_i32_0 : i32, i32, i32
  }
}

</mosaic_0001>

<llo_original>
// kernel: tpu_custom_call.1
$region0: #{tpu_custom_call.1}
  #allocation0 [shape = 'u32[]', space=smem, size = 0x4, offset = 0x4, fixed_abs, tag = 'smem constant byte address 0x4 - core index']
  #allocation1 [shape = 'u32[144,128]{1,0:T(1,128)}', space=vmem, size = 0x12000, scoped, tag = 'internal scratch']
  #allocation2 [shape = 'f32[4,1]{1,0:T(4,128)}', space=vmem, size = 0x800, scoped, tag = 'scratch operand']
  %s0 = inlined_call_operand.hbm [shape: f32[2,4,256], index: 0, kind: input, shape index: {}]
  %s1 = inlined_call_operand.vmem [shape: f32[2,4], index: 1, kind: input, shape index: {}]
  %s2 = inlined_call_operand.vmem [shape: f32[2,1], index: 2, kind: input, shape index: {}]
  %s3 = inlined_call_operand.vmem [shape: f32[4,2], index: 3, kind: input, shape index: {}]
  %s4 = inlined_call_operand.vmem [shape: f32[4,1], index: 4, kind: input, shape index: {}]
  %s5 = inlined_call_operand.vmem [shape: f32[2,4,1], index: 5, kind: output, shape index: {}]
  %s6 = sld [smem:[#allocation0]]
  $region69: #{tpu_custom_call.1} parent=0
    _
  %s8 = ssub.s32 1, %s6
  %s9 = scalar_select 0, %s8, %s6
  $region1: #{tpu_custom_call.1} parent=0
    #allocation3 [shape = 'u8[8192]{0}', space=vmem, size = 0x2000, scoped, tag = 'input window, operand 0']
    #allocation4 [shape = 's32[2]{0}', space=sflag, size = 0x8, scoped, tag = 'scoped memory for tpu_custom_call.1']
    %10 = vsyncpa [#allocation4], 0
    %s11 = scalar_lea.sflag [#allocation4], 1
    %12 = vsyncpa %s11, 0
    loop: start=0, step=1, limit=4
    $region2: #{tpu_custom_call.1} parent=1 // loop_pre_header
      _
    $region3: #{tpu_custom_call.1} parent=1 // loop_header
      %s14 = sphi 0, %s18
      %p15 = scmp.ge.s32.totalorder %s14, 4
      %s21 = sphi 0, %s33
      %s22 = sphi 0, %s29
      %s23 = sphi 0, %s21
      %s24 = sphi 0, %s22
      %s25 = sphi 0, %s23
      %s26 = sphi 0, %s24
      %s38 = sphi 0, %s40
      %s41 = sphi 0, %s38
      %s42 = sphi 0, %s41
      %s58 = sphi 0, %s42
      %s62 = sphi 0, %s62
      %s64 = sphi 0, %s62
      %s65 = sphi 0, %s64
      %s79 = sphi 0, %s65
      %s83 = sphi 0, %s83
      %s85 = sphi 0, %s83
      %s86 = sphi 0, %s85
      %s100 = sphi 0, %s86
      %s104 = sphi 0, %s104
      %s106 = sphi 0, %s104
      %s107 = sphi 0, %s106
      %s121 = sphi 0, %s107
      %s125 = sphi 0, %s125
      %s127 = sphi 0, %s125
      %s128 = sphi 0, %s127
      %s142 = sphi 0, %s128
      %s148 = sphi 0, %s150
      %s151 = sphi 0, %s148
      %s152 = sphi 0, %s151
      %s168 = sphi 0, %s152
    $region4: #{tpu_custom_call.1} parent=1 // loop_header_branch
      %17 = sbr.rel (%p15) target = $region8
    $region5: #{tpu_custom_call.1} parent=1 // loop_body
      %s19 = ssub.s32 %s14, 1
      %s20 = ssub.s32 %s14, 2
      %s27 = sadd.s32 1, %s22
      %p28 = scmp.ge.s32.totalorder %s27, 1
      %s29 = scalar_select %p28, 0, %s27
      %s30 = sadd.s32 1, %s21
      %s31 = scalar_select %p28, %s30, %s21
      %p32 = scmp.ge.s32.totalorder %s31, 2
      %s33 = scalar_select %p32, 0, %s31
      %s34 = ssub.s32 %s21, %s33
      %s35 = ssub.s32 %s22, %s29
      %s36 = sor.u32 %s34, %s35
      %p37 = scmp.eq.s32.totalorder %s36, 0
      %s39 = sadd.s32 %s38, 1
      %s40 = scalar_select %p37, %s38, %s39
      %p43 = pneg %p37
      %p44 = scmp.eq.s32.totalorder %s14, 1
      %p45 = por %p43, %p44
      %p46 = scmp.ne.s32.totalorder %s38, %s41
      %p47 = scmp.eq.s32.totalorder %s14, 0
      %p48 = por %p46, %p47
      %p49 = scmp.ne.s32.totalorder %s38, %s41
      %p50 = scmp.eq.s32.totalorder %s19, 1
      %p51 = por %p49, %p50
      %p52 = scmp.ne.s32.totalorder %s41, %s42
      %p53 = scmp.eq.s32.totalorder %s19, 0
      %p54 = por %p52, %p53
      %p55 = scmp.ne.s32.totalorder %s41, %s42
      %p56 = scmp.eq.s32.totalorder %s20, 1
      %p57 = por %p55, %p56
      %p59 = scmp.ne.s32.totalorder %s42, %s58
      %p60 = scmp.eq.s32.totalorder %s20, 0
      %p61 = por %p59, %p60
      %s63 = sadd.s32 %s62, 1
      %p66 = scmp.eq.s32.totalorder %s14, 1
      %p67 = scmp.ne.s32.totalorder %s62, %s64
      %p68 = scmp.eq.s32.totalorder %s14, 0
      %p69 = por %p67, %p68
      %p70 = scmp.ne.s32.totalorder %s62, %s64
      %p71 = scmp.eq.s32.totalorder %s19, 1
      %p72 = por %p70, %p71
      %p73 = scmp.ne.s32.totalorder %s64, %s65
      %p74 = scmp.eq.s32.totalorder %s19, 0
      %p75 = por %p73, %p74
      %p76 = scmp.ne.s32.totalorder %s64, %s65
      %p77 = scmp.eq.s32.totalorder %s20, 1
      %p78 = por %p76, %p77
      %p80 = scmp.ne.s32.totalorder %s65, %s79
      %p81 = scmp.eq.s32.totalorder %s20, 0
      %p82 = por %p80, %p81
      %s84 = sadd.s32 %s83, 1
      %p87 = scmp.eq.s32.totalorder %s14, 1
      %p88 = scmp.ne.s32.totalorder %s83, %s85
      %p89 = scmp.eq.s32.totalorder %s14, 0
      %p90 = por %p88, %p89
      %p91 = scmp.ne.s32.totalorder %s83, %s85
      %p92 = scmp.eq.s32.totalorder %s19, 1
      %p93 = por %p91, %p92
      %p94 = scmp.ne.s32.totalorder %s85, %s86
      %p95 = scmp.eq.s32.totalorder %s19, 0
      %p96 = por %p94, %p95
      %p97 = scmp.ne.s32.totalorder %s85, %s86
      %p98 = scmp.eq.s32.totalorder %s20, 1
      %p99 = por %p97, %p98
      %p101 = scmp.ne.s32.totalorder %s86, %s100
      %p102 = scmp.eq.s32.totalorder %s20, 0
      %p103 = por %p101, %p102
      %s105 = sadd.s32 %s104, 1
      %p108 = scmp.eq.s32.totalorder %s14, 1
      %p109 = scmp.ne.s32.totalorder %s104, %s106
      %p110 = scmp.eq.s32.totalorder %s14, 0
      %p111 = por %p109, %p110
      %p112 = scmp.ne.s32.totalorder %s104, %s106
      %p113 = scmp.eq.s32.totalorder %s19, 1
      %p114 = por %p112, %p113
      %p115 = scmp.ne.s32.totalorder %s106, %s107
      %p116 = scmp.eq.s32.totalorder %s19, 0
      %p117 = por %p115, %p116
      %p118 = scmp.ne.s32.totalorder %s106, %s107
      %p119 = scmp.eq.s32.totalorder %s20, 1
      %p120 = por %p118, %p119
      %p122 = scmp.ne.s32.totalorder %s107, %s121
      %p123 = scmp.eq.s32.totalorder %s20, 0
      %p124 = por %p122, %p123
      %s126 = sadd.s32 %s125, 1
      %p129 = scmp.eq.s32.totalorder %s14, 1
      %p130 = scmp.ne.s32.totalorder %s125, %s127
      %p131 = scmp.eq.s32.totalorder %s14, 0
      %p132 = por %p130, %p131
      %p133 = scmp.ne.s32.totalorder %s125, %s127
      %p134 = scmp.eq.s32.totalorder %s19, 1
      %p135 = por %p133, %p134
      %p136 = scmp.ne.s32.totalorder %s127, %s128
      %p137 = scmp.eq.s32.totalorder %s19, 0
      %p138 = por %p136, %p137
      %p139 = scmp.ne.s32.totalorder %s127, %s128
      %p140 = scmp.eq.s32.totalorder %s20, 1
      %p141 = por %p139, %p140
      %p143 = scmp.ne.s32.totalorder %s128, %s142
      %p144 = scmp.eq.s32.totalorder %s20, 0
      %p145 = por %p143, %p144
      %s146 = ssub.s32 %s21, %s33
      %p147 = scmp.eq.s32.totalorder %s146, 0
      %s149 = sadd.s32 %s148, 1
      %s150 = scalar_select %p147, %s148, %s149
      %p153 = pneg %p147
      %p154 = scmp.eq.s32.totalorder %s14, 1
      %p155 = por %p153, %p154
      %p156 = scmp.ne.s32.totalorder %s148, %s151
      %p157 = scmp.eq.s32.totalorder %s14, 0
      %p158 = por %p156, %p157
      %p159 = scmp.ne.s32.totalorder %s148, %s151
      %p160 = scmp.eq.s32.totalorder %s19, 1
      %p161 = por %p159, %p160
      %p162 = scmp.ne.s32.totalorder %s151, %s152
      %p163 = scmp.eq.s32.totalorder %s19, 0
      %p164 = por %p162, %p163
      %p165 = scmp.ne.s32.totalorder %s151, %s152
      %p166 = scmp.eq.s32.totalorder %s20, 1
      %p167 = por %p165, %p166
      %p169 = scmp.ne.s32.totalorder %s152, %s168
      %p170 = scmp.eq.s32.totalorder %s20, 0
      %p171 = por %p169, %p170
      %p172 = scmp.le.s32.totalorder 1, %s14
      %p173 = scmp.lt.s32.totalorder %s14, 3
      %p174 = pnand %p172, %p173
      %p175 = pneg %p174
      // Predicated region
      $region9: #{tpu_custom_call.1} parent=5 // pred_check
        _
      $region10: #{tpu_custom_call.1} parent=5 // pred_check_branch
        %177 = sbr.rel (%p174) target = $region12
      $region11: #{tpu_custom_call.1} parent=5 // pred_region
        %s178 = ssub.s32 %s14, 1
        // Predicated region
        $region13: #{tpu_custom_call.1} parent=11 // pred_check
          %p179 = pneg %p75
        $region14: #{tpu_custom_call.1} parent=11 // pred_check_branch
          %181 = sbr.rel (%p179) target = $region16
        $region15: #{tpu_custom_call.1} parent=11 // pred_region
          _
        $region16: #{tpu_custom_call.1} parent=11 // pred_fallthru
          _
        // Predicated region
        $region17: #{tpu_custom_call.1} parent=11 // pred_check
          %p182 = pneg %p96
        $region18: #{tpu_custom_call.1} parent=11 // pred_check_branch
          %184 = sbr.rel (%p182) target = $region20
        $region19: #{tpu_custom_call.1} parent=11 // pred_region
          _
        $region20: #{tpu_custom_call.1} parent=11 // pred_fallthru
          _
        // Predicated region
        $region21: #{tpu_custom_call.1} parent=11 // pred_check
          %p185 = pneg %p117
        $region22: #{tpu_custom_call.1} parent=11 // pred_check_branch
          %187 = sbr.rel (%p185) target = $region24
        $region23: #{tpu_custom_call.1} parent=11 // pred_region
          _
        $region24: #{tpu_custom_call.1} parent=11 // pred_fallthru
          _
        // Predicated region
        $region25: #{tpu_custom_call.1} parent=11 // pred_check
          %p188 = pneg %p138
        $region26: #{tpu_custom_call.1} parent=11 // pred_check_branch
          %190 = sbr.rel (%p188) target = $region28
        $region27: #{tpu_custom_call.1} parent=11 // pred_region
          _
        $region28: #{tpu_custom_call.1} parent=11 // pred_fallthru
          _
      $region12: #{tpu_custom_call.1} parent=5 // pred_fallthru
        _
      %p191 = scmp.lt.s32.totalorder %s14, 2
      // Predicated region
      $region29: #{tpu_custom_call.1} parent=5 // pred_check
        %p192 = pneg %p191
      $region30: #{tpu_custom_call.1} parent=5 // pred_check_branch
        %194 = sbr.rel (%p192) target = $region32
      $region31: #{tpu_custom_call.1} parent=5 // pred_region
        // Predicated region
        $region33: #{tpu_custom_call.1} parent=31 // pred_check
          %p195 = pneg %p48
        $region34: #{tpu_custom_call.1} parent=31 // pred_check_branch
          %197 = sbr.rel (%p195) target = $region36
        $region35: #{tpu_custom_call.1} parent=31 // pred_region
          %s198 = sand.u32 %s38, 1
          %s199 = scalar_lea.sflag [#allocation4], %s198
          %s200 = sand.u32 %s38, 1
          %s201 = smul.addr %s200, 8
          %s202 = scalar_lea.vmem [#allocation3], %s201
          %s203 = smul.u32 2, %s22
          %s205 = ssub.s32 128, 128
          %206 = vsyncadd %s199, %s205
          %s207 = smul.addr %s21, 2
          %s208 = sadd.s32 %s203, %s207
          %s209 = smul.addr %s208, 64
          %s210 = scalar_lea.hbm %s0, %s209
          %s212 = sshll.u32 %s202, 4
          %s213 = int_to_ptr.vmem [resolvable:$true] %s212
          %215 = dma.hbm_to_vmem [thread:$0]  %s210, 128, %s213, %s199
        $region36: #{tpu_custom_call.1} parent=31 // pred_fallthru
          _
      $region32: #{tpu_custom_call.1} parent=5 // pred_fallthru
        _
      %p216 = scmp.le.s32.totalorder 1, %s14
      %p217 = scmp.lt.s32.totalorder %s14, 3
      %p218 = pnand %p216, %p217
      %p219 = pneg %p218
      // Predicated region
      $region37: #{tpu_custom_call.1} parent=5 // pred_check
        _
      $region38: #{tpu_custom_call.1} parent=5 // pred_check_branch
        %221 = sbr.rel (%p218) target = $region40
      $region39: #{tpu_custom_call.1} parent=5 // pred_region
        %s222 = ssub.s32 %s14, 1
        %s223 = sand.u32 %s41, 1
        %s224 = scalar_lea.sflag [#allocation4], %s223
        %s225 = sand.u32 %s41, 1
        %s226 = smul.addr %s225, 8
        %s227 = scalar_lea.vmem [#allocation3], %s226
        // Predicated region
        $region41: #{tpu_custom_call.1} parent=39 // pred_check
          %p228 = pneg %p54
        $region42: #{tpu_custom_call.1} parent=39 // pred_check_branch
          %230 = sbr.rel (%p228) target = $region44
        $region43: #{tpu_custom_call.1} parent=39 // pred_region
          %231 = dma.done %s224, 128
        $region44: #{tpu_custom_call.1} parent=39 // pred_fallthru
          _
        %s232 = sand.u32 %s41, 1
        %s233 = scalar_lea.sflag [#allocation4], %s232
        %s234 = sand.u32 %s41, 1
        %s235 = smul.addr %s234, 8
        %s236 = scalar_lea.vmem [#allocation3], %s235
        %p237 = pneg %p54
        %p238 = pneg %p51
        %p239 = pneg %p75
        %p240 = pneg %p72
        %p241 = pneg %p96
        %p242 = pneg %p93
        %p243 = pneg %p117
        %p244 = pneg %p114
        %p245 = pneg %p138
        %p246 = pneg %p135
        %p247 = pneg %p164
        %p248 = pneg %p161
        %p249 = scmp.lt.s32.totalorder %s23, 1
        %s250 = scalar_select %p249, %s23, 1
        %s251 = smul.addr %s250, 4
        %s252 = scalar_lea.vmem %s5, %s251
        %s253 = smul.u32 2, %s24
        %p254 = scmp.lt.s32.totalorder %s23, 1
        %s255 = scalar_select %p254, %s23, 1
        %s256 = smul.addr %s255, 4
        %s257 = scalar_lea.vmem %s5, %s256
        %v258 = vld [vmem:[%s227] sm:$0xff]
        %v260 = vcombine.high %v258, %v258
        %vm262 = vcmask 1043456
        %v263 = vsel %vm262, %v258, 0.0
        %v264 = vsel %vm262, %v260, 0.0
        %v265 = vadd.f32 %v263, %v264
        %266 = vadd.xlane.f32.xlu0 %v265
        %v267 = vpop.xlane.xlu0 %266
        %p268 = scmp.eq.s32.totalorder %s24, 0
        // Predicated region
        $region45: #{tpu_custom_call.1} parent=39 // pred_check
          %p269 = pneg %p268
        $region46: #{tpu_custom_call.1} parent=39 // pred_check_branch
          %271 = sbr.rel (%p269) target = $region48
        $region47: #{tpu_custom_call.1} parent=39 // pred_region
          %vm272 = vcmask 3072
          %273 = vst.msk [vmem:[#allocation2] sm:$0xf] %vm272, %v267
        $region48: #{tpu_custom_call.1} parent=39 // pred_fallthru
          _
        %p274 = scmp.ne.s32.totalorder %s24, 0
        // Predicated region
        $region49: #{tpu_custom_call.1} parent=39 // pred_check
          %p275 = pneg %p274
        $region50: #{tpu_custom_call.1} parent=39 // pred_check_branch
          %277 = sbr.rel (%p275) target = $region52
        $region51: #{tpu_custom_call.1} parent=39 // pred_region
          %v278 = vld [vmem:[#allocation2] sm:$0xf]
          %v279 = vadd.f32 %v278, %v267
          %vm280 = vcmask 3072
          %281 = vst.msk [vmem:[#allocation2] sm:$0xf] %vm280, %v279
        $region52: #{tpu_custom_call.1} parent=39 // pred_fallthru
          _
        // Predicated region
        $region53: #{tpu_custom_call.1} parent=39 // pred_check
          %p282 = pneg %p268
        $region54: #{tpu_custom_call.1} parent=39 // pred_check_branch
          %284 = sbr.rel (%p282) target = $region56
        $region55: #{tpu_custom_call.1} parent=39 // pred_region
          %v285 = vld [vmem:[#allocation2] sm:$0xf]
          %v286 = vmul.f32 %v285, 0.00390625
          %v287 = vld [vmem:[%s1] sm:$0x3]
          %v288 = vld [vmem:[%s2] sm:$0x3]
          %vm289 = vcmask 31744
          %v291 = vsel %vm289, %v287, 0
          %v294 = vsel %vm262, %v286, 0
          %296 = vmatprep.subr.mxu0 0.0
          %297 = vmatpush1.msra.mxu0 0.0
          %298 = vmatprep.subr.mxu0 0.0
          %299 = vmatpush1.msra.mxu0 0.0
          %300 = vmatprep.subr.mxu0 0.0
          %301 = vmatpush1.msra.mxu0 0.0
          %302 = vmatprep.subr.mxu0 0.0
          %303 = vmatpush1.msra.mxu0 0.0
          %304 = vmatprep.subr.mxu0 0.0
          %305 = vmatpush1.msra.mxu0 0.0
          %306 = vmatprep.subr.mxu0 0.0
          %307 = vmatpush1.msra.mxu0 0.0
          %308 = vmatprep.subr.mxu0 0.0
          %309 = vmatpush1.msra.mxu0 0.0
          %310 = vmatprep.subr.mxu0 0.0
          %311 = vmatpush1.msra.mxu0 0.0
          %312 = vmatprep.subr.mxu0 0.0
          %313 = vmatpush1.msra.mxu0 0.0
          %314 = vmatprep.subr.mxu0 0.0
          %315 = vmatpush1.msra.mxu0 0.0
          %316 = vmatprep.subr.mxu0 0.0
          %317 = vmatpush1.msra.mxu0 0.0
          %318 = vmatprep.subr.mxu0 0.0
          %319 = vmatpush1.msra.mxu0 0.0
          %320 = vmatprep.subr.mxu0 0.0
          %321 = vmatpush1.msra.mxu0 0.0
          %322 = vmatprep.subr.mxu0 0.0
          %323 = vmatpush1.msra.mxu0 0.0
          %324 = vmatprep.subr.mxu0 0.0
          %325 = vmatpush1.msra.mxu0 0.0
          %326 = vmatprep.subr.mxu0 0.0
          %327 = vmatpush1.msra.mxu0 %v294
          %328 = vmatprep.subr.mxu0 0.0
          %329 = vmatpush2.msra.mxu0 0.0
          %330 = vmatprep.subr.mxu0 0.0
          %331 = vmatpush2.msra.mxu0 0.0
          %332 = vmatprep.subr.mxu0 0.0
          %333 = vmatpush2.msra.mxu0 0.0
          %334 = vmatprep.subr.mxu0 0.0
          %335 = vmatpush2.msra.mxu0 0.0
          %336 = vmatprep.subr.mxu0 0.0
          %337 = vmatpush2.msra.mxu0 0.0
          %338 = vmatprep.subr.mxu0 0.0
          %339 = vmatpush2.msra.mxu0 0.0
          %340 = vmatprep.subr.mxu0 0.0
          %341 = vmatpush2.msra.mxu0 0.0
          %342 = vmatprep.subr.mxu0 0.0
          %343 = vmatpush2.msra.mxu0 0.0
          %344 = vmatprep.subr.mxu0 0.0
          %345 = vmatpush2.msra.mxu0 0.0
          %346 = vmatprep.subr.mxu0 0.0
          %347 = vmatpush2.msra.mxu0 0.0
          %348 = vmatprep.subr.mxu0 0.0
          %349 = vmatpush2.msra.mxu0 0.0
          %350 = vmatprep.subr.mxu0 0.0
          %351 = vmatpush2.msra.mxu0 0.0
          %352 = vmatprep.subr.mxu0 0.0
          %353 = vmatpush2.msra.mxu0 0.0
          %354 = vmatprep.subr.mxu0 0.0
          %355 = vmatpush2.msra.mxu0 0.0
          %356 = vmatprep.subr.mxu0 0.0
          %357 = vmatpush2.msra.mxu0 0.0
          %358 = vmatprep.subr.mxu0 0.0
          %359 = vmatpush2.msra.mxu0 0.0
          %360 = vmatprep.mubr.f32.mxu0 0.0
          %361 = vmatmul.mubr.f32.gmra.mxu0 %v291
          %v362 = vpop.f32.mrf.mxu0
          %v363 = vadd.f32 %v288, %v362
          %v364 = vpop.f32.mrf.mxu0
          %365 = vdwg.mxu0
          %v366 = vmax.f32 %v363, 0.0
          %v367 = vld [vmem:[%s3] sm:$0xf]
          %v368 = vld [vmem:[%s4] sm:$0xf]
          %vm369 = vcmask 15360
          %v371 = vsel %vm369, %v367, 0
          %vm373 = vcmask 1041408
          %v375 = vsel %vm373, %v366, 0
          %377 = vmatprep.subr.mxu0 0.0
          %378 = vmatpush1.msra.mxu0 0.0
          %379 = vmatprep.subr.mxu0 0.0
          %380 = vmatpush1.msra.mxu0 0.0
          %381 = vmatprep.subr.mxu0 0.0
          %382 = vmatpush1.msra.mxu0 0.0
          %383 = vmatprep.subr.mxu0 0.0
          %384 = vmatpush1.msra.mxu0 0.0
          %385 = vmatprep.subr.mxu0 0.0
          %386 = vmatpush1.msra.mxu0 0.0
          %387 = vmatprep.subr.mxu0 0.0
          %388 = vmatpush1.msra.mxu0 0.0
          %389 = vmatprep.subr.mxu0 0.0
          %390 = vmatpush1.msra.mxu0 0.0
          %391 = vmatprep.subr.mxu0 0.0
          %392 = vmatpush1.msra.mxu0 0.0
          %393 = vmatprep.subr.mxu0 0.0
          %394 = vmatpush1.msra.mxu0 0.0
          %395 = vmatprep.subr.mxu0 0.0
          %396 = vmatpush1.msra.mxu0 0.0
          %397 = vmatprep.subr.mxu0 0.0
          %398 = vmatpush1.msra.mxu0 0.0
          %399 = vmatprep.subr.mxu0 0.0
          %400 = vmatpush1.msra.mxu0 0.0
          %401 = vmatprep.subr.mxu0 0.0
          %402 = vmatpush1.msra.mxu0 0.0
          %403 = vmatprep.subr.mxu0 0.0
          %404 = vmatpush1.msra.mxu0 0.0
          %405 = vmatprep.subr.mxu0 0.0
          %406 = vmatpush1.msra.mxu0 0.0
          %407 = vmatprep.subr.mxu0 0.0
          %408 = vmatpush1.msra.mxu0 %v375
          %409 = vmatprep.subr.mxu0 0.0
          %410 = vmatpush2.msra.mxu0 0.0
          %411 = vmatprep.subr.mxu0 0.0
          %412 = vmatpush2.msra.mxu0 0.0
          %413 = vmatprep.subr.mxu0 0.0
          %414 = vmatpush2.msra.mxu0 0.0
          %415 = vmatprep.subr.mxu0 0.0
          %416 = vmatpush2.msra.mxu0 0.0
          %417 = vmatprep.subr.mxu0 0.0
          %418 = vmatpush2.msra.mxu0 0.0
          %419 = vmatprep.subr.mxu0 0.0
          %420 = vmatpush2.msra.mxu0 0.0
          %421 = vmatprep.subr.mxu0 0.0
          %422 = vmatpush2.msra.mxu0 0.0
          %423 = vmatprep.subr.mxu0 0.0
          %424 = vmatpush2.msra.mxu0 0.0
          %425 = vmatprep.subr.mxu0 0.0
          %426 = vmatpush2.msra.mxu0 0.0
          %427 = vmatprep.subr.mxu0 0.0
          %428 = vmatpush2.msra.mxu0 0.0
          %429 = vmatprep.subr.mxu0 0.0
          %430 = vmatpush2.msra.mxu0 0.0
          %431 = vmatprep.subr.mxu0 0.0
          %432 = vmatpush2.msra.mxu0 0.0
          %433 = vmatprep.subr.mxu0 0.0
          %434 = vmatpush2.msra.mxu0 0.0
          %435 = vmatprep.subr.mxu0 0.0
          %436 = vmatpush2.msra.mxu0 0.0
          %437 = vmatprep.subr.mxu0 0.0
          %438 = vmatpush2.msra.mxu0 0.0
          %439 = vmatprep.subr.mxu0 0.0
          %440 = vmatpush2.msra.mxu0 0.0
          %441 = vmatprep.mubr.f32.mxu0 0.0
          %442 = vmatmul.mubr.f32.gmra.mxu0 %v371
          %v443 = vpop.f32.mrf.mxu0
          %v444 = vadd.f32 %v368, %v443
          %v445 = vpop.f32.mrf.mxu0
          %446 = vdwg.mxu0
          %v447 = vxor.u32 %v444, 2147483648
          %v448 = vmul.f32 %v447, 1.442695
          %v449 = vpow.pop %v448
          %v450 = vadd.f32 %v449, 1.0
          %v451 = vrcp.pop %v450
          %v452 = vmul.f32 1.0, %v451
          %vm453 = vcmask 3072
          %454 = vst.msk [vmem:[%s257] sm:$0xf] %vm453, %v452
        $region56: #{tpu_custom_call.1} parent=39 // pred_fallthru
          _
        %p455 = scmp.lt.s32.totalorder %s23, 1
        %s456 = scalar_select %p455, %s23, 1
        %s457 = smul.addr %s456, 4
        %s458 = scalar_lea.vmem %s5, %s457
        // Predicated region
        $region57: #{tpu_custom_call.1} parent=39 // pred_check
          %p459 = pneg %p161
        $region58: #{tpu_custom_call.1} parent=39 // pred_check_branch
          %461 = sbr.rel (%p459) target = $region60
        $region59: #{tpu_custom_call.1} parent=39 // pred_region
          _
        $region60: #{tpu_custom_call.1} parent=39 // pred_fallthru
          _
      $region40: #{tpu_custom_call.1} parent=5 // pred_fallthru
        _
      %p462 = scmp.le.s32.totalorder 2, %s14
      // Predicated region
      $region61: #{tpu_custom_call.1} parent=5 // pred_check
        %p463 = pneg %p462
      $region62: #{tpu_custom_call.1} parent=5 // pred_check_branch
        %465 = sbr.rel (%p463) target = $region64
      $region63: #{tpu_custom_call.1} parent=5 // pred_region
        %s466 = ssub.s32 %s14, 2
        // Predicated region
        $region65: #{tpu_custom_call.1} parent=63 // pred_check
          %p467 = pneg %p167
        $region66: #{tpu_custom_call.1} parent=63 // pred_check_branch
          %469 = sbr.rel (%p467) target = $region68
        $region67: #{tpu_custom_call.1} parent=63 // pred_region
          %p470 = scmp.lt.s32.totalorder %s25, 1
          %s471 = scalar_select %p470, %s25, 1
          %s472 = smul.addr %s471, 4
          %s473 = scalar_lea.vmem %s5, %s472
        $region68: #{tpu_custom_call.1} parent=63 // pred_fallthru
          _
      $region64: #{tpu_custom_call.1} parent=5 // pred_fallthru
        _
    $region6: #{tpu_custom_call.1} parent=1 // loop_footer
      %s18 = sadd.s32 1, %s14
    $region7: #{tpu_custom_call.1} parent=1 // loop_footer_branch
      %13 = sbr.rel target = $region3
    $region8: #{tpu_custom_call.1} parent=1 // loop_exit
      _
    %474 = vsyncpa [#allocation4], 1
    %s475 = scalar_lea.sflag [#allocation4], 1
    %476 = vsyncpa %s475, 1

</llo_original>
